<compile_context>
chip_gen: v5e
topology: v5e:2x2
jax: 0.10.0
libtpu: 0.0.40
codegen_flags: <defaults>
</compile_context>

<pallas_src>
import jax
import jax.numpy as jnp
from jax.experimental import pallas as pl
from jax.experimental.pallas import tpu as pltpu


def _round_up(v, m):
    return ((v + m - 1) // m) * m


# ----------------------------- fused Pallas model ---------------------------

class PallasGnn:
    """Fused Pallas TPU implementation of the PyTorch Gnn forward pass (eval mode)."""

    def __init__(self, params):
        w_r1, w_n1 = params["init"]["w_root"], params["init"]["w_nbr"]
        w_r2, w_n2 = params["layer1"]["w_root"], params["layer1"]["w_nbr"]
        w_o = params["out"]["w"]

        self.f_in = int(w_r1.shape[0])
        self.hidden = int(w_r1.shape[1])
        self.out_dim = int(w_o.shape[1])
        self.slab_lanes = max(128, _round_up(self.out_dim, 128))  # lane-dense head

        # Stack root/neighbor weights so each GraphConv is a single MXU matmul:
        #   [x | A@x] @ [W_root ; W_nbr]
        w1 = jnp.concatenate([w_r1, w_n1], axis=0)  # [2*F_in, H]
        w2 = jnp.concatenate([w_r2, w_n2], axis=0)  # [2*H,   H]

        # One-time packing of all weights into a single lane-dense bf16 slab.
        # Region starts are multiples of 16 rows (bf16 sublane packing).
        self.off1 = 0
        self.off2 = _round_up(self.off1 + w1.shape[0], 16)
        self.off3 = _round_up(self.off2 + w2.shape[0], 16)
        k_total = _round_up(self.off3 + w_o.shape[0], 16)

        slab = jnp.zeros((k_total, self.slab_lanes), jnp.float32)
        slab = slab.at[self.off1:self.off1 + w1.shape[0], :self.hidden].set(w1)
        slab = slab.at[self.off2:self.off2 + w2.shape[0], :self.hidden].set(w2)
        slab = slab.at[self.off3:self.off3 + w_o.shape[0], :self.out_dim].set(w_o)
        self.w_slab = slab.astype(jnp.bfloat16)

        b_slab = jnp.zeros((3, self.slab_lanes), jnp.float32)  # biases stay f32
        b_slab = b_slab.at[0, :self.hidden].set(params["init"]["b"][0])
        b_slab = b_slab.at[1, :self.hidden].set(params["layer1"]["b"][0])
        b_slab = b_slab.at[2, :self.out_dim].set(params["out"]["b"][0])
        self.b_slab = b_slab

        self._kernel = self._make_kernel()
        self._forward = jax.jit(self._forward_impl)

    # ---- kernel body (static dims captured by closure) ----------------------
    def _make_kernel(self):
        f_in, hidden = self.f_in, self.hidden
        off1, off2, off3 = self.off1, self.off2, self.off3

        def kernel(x_ref, a_ref, w_ref, b_ref, o_ref):
            a = a_ref[...]                         # bf16 [N, N]
            x = x_ref[...]                         # bf16 [N, F_in]

            # --- GraphConv #1 + tanh (dropout = identity in eval mode) --------
            aggr1 = jnp.dot(a, x, preferred_element_type=jnp.float32).astype(jnp.bfloat16)
            xa1 = jnp.concatenate([x, aggr1], axis=-1)                 # [N, 2*F_in]
            h1 = (jnp.dot(xa1, w_ref[off1:off1 + 2 * f_in, :hidden],
                          preferred_element_type=jnp.float32)
                  + b_ref[0:1, :hidden])
            h1c = jnp.tanh(h1).astype(jnp.bfloat16)                    # f32 tanh on EUP

            # --- GraphConv #2 + tanh ------------------------------------------
            aggr2 = jnp.dot(a, h1c, preferred_element_type=jnp.float32).astype(jnp.bfloat16)
            xa2 = jnp.concatenate([h1c, aggr2], axis=-1)               # [N, 2*H]
            h2 = (jnp.dot(xa2, w_ref[off2:off2 + 2 * hidden, :hidden],
                          preferred_element_type=jnp.float32)
                  + b_ref[1:2, :hidden])
            h2c = jnp.tanh(h2).astype(jnp.bfloat16)

            # --- Linear head (zero-padded to 128 lanes -> unmasked full vst) ---
            out = (jnp.dot(h2c, w_ref[off3:off3 + hidden, :],
                           preferred_element_type=jnp.float32)
                   + b_ref[2:3, :])
            o_ref[...] = out.astype(o_ref.dtype)

        return kernel

    # ---- per-call forward graph: adjacency build + pallas_call + slice ------
    def _forward_impl(self, w_slab, b_slab, x, edge_index):
        n = x.shape[0]

        # Dense adjacency A[i, j] = #edges j->i via a one-hot matmul (MXU, not scatter).
        # Exact in bf16 while edge multiplicities are integers <= 256.
        src, dst = edge_index[0], edge_index[1]
        oh_dst = jax.nn.one_hot(dst, n, dtype=jnp.bfloat16)            # [E, N]
        oh_src = jax.nn.one_hot(src, n, dtype=jnp.bfloat16)            # [E, N]
        adj = jnp.dot(oh_dst.T, oh_src,
                      preferred_element_type=jnp.float32).astype(jnp.bfloat16)

        f_in, hid, lanes = self.f_in, self.hidden, self.slab_lanes
        flops = 2 * n * (n * f_in + 2 * f_in * hid + n * hid + 2 * hid * hid + hid * lanes)
        bytes_accessed = (n * f_in * 2 + n * n * 2 + w_slab.size * 2
                          + b_slab.size * 4 + n * lanes * 4)
        cost = pl.CostEstimate(flops=int(flops), transcendentals=2 * n * hid,
                               bytes_accessed=int(bytes_accessed))

        vmem = lambda: pl.BlockSpec(memory_space=pltpu.MemorySpace.VMEM)
        y = pl.pallas_call(
            self._kernel,
            out_shape=jax.ShapeDtypeStruct((n, lanes), jnp.float32),
            in_specs=[vmem() for _ in range(4)],
            out_specs=vmem(),
            cost_estimate=cost,
        )(x.astype(jnp.bfloat16), adj, w_slab, b_slab)
        return y[:, :self.out_dim]

    def __call__(self, x, edge_index):
        return self._forward(self.w_slab, self.b_slab, x, edge_index)


# ----------------------------- parameters -----------------------------------

def make_params(key, input_dim, hidden_dim, output_dim):
    """Deterministic synthetic parameters (shapes follow the PyTorch module).

    Weights stored [F_in, F_out] (transpose of torch.nn.Linear.weight) so every matmul
    in the kernel is a plain X @ W on the MXU.
    """
    ks = jax.random.split(key, 9)

    def w(k, fi, fo):
        return (jax.random.normal(k, (fi, fo), jnp.float32) / jnp.sqrt(fi)).astype(jnp.float32)

    def bias(k, fo):
        return jax.random.normal(k, (1, fo), jnp.float32) * 0.01

    return {
        "init": {"w_root": w(ks[0], input_dim, hidden_dim),
                 "w_nbr": w(ks[1], input_dim, hidden_dim),
                 "b": bias(ks[2], hidden_dim)},
        "layer1": {"w_root": w(ks[3], hidden_dim, hidden_dim),
                   "w_nbr": w(ks[4], hidden_dim, hidden_dim),
                   "b": bias(ks[5], hidden_dim)},
        "out": {"w": w(ks[6], hidden_dim, output_dim),
                "b": bias(ks[7], output_dim)},
    }


# ----------------------------- main ------------------------------------------

if __name__ == "__main__":
    input_dim, hidden_dim, output_dim = 4, 32, 2
    num_nodes = 16

    key = jax.random.PRNGKey(0)
    k_x, k_p = jax.random.split(key)

    # Node features [N, input_dim]
    x = jax.random.normal(k_x, (num_nodes, input_dim), jnp.float32)

    # Deterministic bidirectional ring graph, edge_index [2, E] (src row 0, dst row 1,
    # matching PyG flow='source_to_target').
    idx = jnp.arange(num_nodes, dtype=jnp.int32)
    src = jnp.concatenate([idx, (idx + 1) % num_nodes])
    dst = jnp.concatenate([(idx + 1) % num_nodes, idx])
    edge_index = jnp.stack([src, dst])  # [2, 2N]

    params = make_params(k_p, input_dim, hidden_dim, output_dim)
    model = PallasGnn(params)   # one-time weight stacking / packing / bf16 cast

    out = model(x, edge_index)
    jax.block_until_ready(out)
    assert out.shape == (num_nodes, output_dim)
    assert bool(jnp.all(jnp.isfinite(out)))
    # NOTE: bf16 MXU operands with f32 accumulation -> expect ~1e-2 rel. tol. vs f32 torch.
    print("KERNEL_OK")
</pallas_src>

<mosaic_0001>
module attributes {stable_mosaic.version = 11 : i64} {
  func.func @kernel(%arg0: memref<16x4xbf16, #tpu.memory_space<vmem>>, %arg1: memref<16x16xbf16, #tpu.memory_space<vmem>>, %arg2: memref<112x128xbf16, #tpu.memory_space<vmem>>, %arg3: memref<3x128xf32, #tpu.memory_space<vmem>>, %arg4: memref<16x128xf32, #tpu.memory_space<vmem>>) attributes {dimension_semantics = [], scalar_prefetch = 0 : i64, scratch_operands = 0 : i64, tpu.core_type = #tpu.core_type<tc>} {
    %c0 = arith.constant 0 : index
    %c0_0 = arith.constant 0 : index
    %0 = vector.load %arg1[%c0, %c0_0] : memref<16x16xbf16, #tpu.memory_space<vmem>>, vector<16x16xbf16>
    %c0_1 = arith.constant 0 : index
    %c0_2 = arith.constant 0 : index
    %1 = vector.load %arg0[%c0_1, %c0_2] : memref<16x4xbf16, #tpu.memory_space<vmem>>, vector<16x4xbf16>
    %cst = arith.constant dense<0.000000e+00> : vector<16x4xf32>
    %2 = tpu.matmul %0, %1, %cst {dimension_numbers = #tpu.dot_dimension_numbers<[1], [0], [0], [1], [0, 0, 1, 1], [], []>} : vector<16x16xbf16>, vector<16x4xbf16>, vector<16x4xf32> -> vector<16x4xf32>
    %3 = arith.truncf %2 : vector<16x4xf32> to vector<16x4xbf16>
    %4 = tpu.concatenate %1, %3 in 1 : vector<16x4xbf16>, vector<16x4xbf16> -> vector<16x8xbf16>
    %c0_3 = arith.constant 0 : index
    %c0_4 = arith.constant 0 : index
    %5 = vector.load %arg2[%c0_3, %c0_4] : memref<112x128xbf16, #tpu.memory_space<vmem>>, vector<8x32xbf16>
    %cst_5 = arith.constant dense<0.000000e+00> : vector<16x32xf32>
    %6 = tpu.matmul %4, %5, %cst_5 {dimension_numbers = #tpu.dot_dimension_numbers<[1], [0], [0], [1], [0, 0, 1, 1], [], []>} : vector<16x8xbf16>, vector<8x32xbf16>, vector<16x32xf32> -> vector<16x32xf32>
    %c0_6 = arith.constant 0 : index
    %c0_7 = arith.constant 0 : index
    %7 = vector.load %arg3[%c0_6, %c0_7] : memref<3x128xf32, #tpu.memory_space<vmem>>, vector<1x32xf32>
    %8 = vector.broadcast %7 : vector<1x32xf32> to vector<16x32xf32>
    %9 = arith.addf %6, %8 : vector<16x32xf32>
    %10 = math.tanh %9 : vector<16x32xf32>
    %11 = arith.truncf %10 : vector<16x32xf32> to vector<16x32xbf16>
    %cst_8 = arith.constant dense<0.000000e+00> : vector<16x32xf32>
    %12 = tpu.matmul %0, %11, %cst_8 {dimension_numbers = #tpu.dot_dimension_numbers<[1], [0], [0], [1], [0, 0, 1, 1], [], []>} : vector<16x16xbf16>, vector<16x32xbf16>, vector<16x32xf32> -> vector<16x32xf32>
    %13 = arith.truncf %12 : vector<16x32xf32> to vector<16x32xbf16>
    %14 = tpu.concatenate %11, %13 in 1 : vector<16x32xbf16>, vector<16x32xbf16> -> vector<16x64xbf16>
    %c16 = arith.constant 16 : index
    %c0_9 = arith.constant 0 : index
    %15 = vector.load %arg2[%c16, %c0_9] : memref<112x128xbf16, #tpu.memory_space<vmem>>, vector<64x32xbf16>
    %cst_10 = arith.constant dense<0.000000e+00> : vector<16x32xf32>
    %16 = tpu.matmul %14, %15, %cst_10 {dimension_numbers = #tpu.dot_dimension_numbers<[1], [0], [0], [1], [0, 0, 1, 1], [], []>} : vector<16x64xbf16>, vector<64x32xbf16>, vector<16x32xf32> -> vector<16x32xf32>
    %c1 = arith.constant 1 : index
    %c0_11 = arith.constant 0 : index
    %17 = vector.load %arg3[%c1, %c0_11] : memref<3x128xf32, #tpu.memory_space<vmem>>, vector<1x32xf32>
    %18 = vector.broadcast %17 : vector<1x32xf32> to vector<16x32xf32>
    %19 = arith.addf %16, %18 : vector<16x32xf32>
    %20 = math.tanh %19 : vector<16x32xf32>
    %21 = arith.truncf %20 : vector<16x32xf32> to vector<16x32xbf16>
    %c80 = arith.constant 80 : index
    %c0_12 = arith.constant 0 : index
    %22 = vector.load %arg2[%c80, %c0_12] : memref<112x128xbf16, #tpu.memory_space<vmem>>, vector<32x128xbf16>
    %cst_13 = arith.constant dense<0.000000e+00> : vector<16x128xf32>
    %23 = tpu.matmul %21, %22, %cst_13 {dimension_numbers = #tpu.dot_dimension_numbers<[1], [0], [0], [1], [0, 0, 1, 1], [], []>} : vector<16x32xbf16>, vector<32x128xbf16>, vector<16x128xf32> -> vector<16x128xf32>
    %c2 = arith.constant 2 : index
    %c0_14 = arith.constant 0 : index
    %24 = vector.load %arg3[%c2, %c0_14] : memref<3x128xf32, #tpu.memory_space<vmem>>, vector<1x128xf32>
    %25 = vector.broadcast %24 : vector<1x128xf32> to vector<16x128xf32>
    %26 = arith.addf %23, %25 : vector<16x128xf32>
    %c0_15 = arith.constant 0 : index
    %c0_16 = arith.constant 0 : index
    %27 = vector.load %arg4[%c0_15, %c0_16] : memref<16x128xf32, #tpu.memory_space<vmem>>, vector<16x128xf32>
    tpu.vector_store %arg4[%c0_15, %c0_16], %26 {strides = array<i32>} : memref<16x128xf32, #tpu.memory_space<vmem>>, vector<16x128xf32>,
    return
  }
}

</mosaic_0001>

<llo_original>
// kernel: _forward_impl.1
$region0: #{_forward_impl.1}
  #allocation0 [shape = 'u32[]', space=smem, size = 0x4, offset = 0x4, fixed_abs, tag = 'smem constant byte address 0x4 - core index']
  #allocation1 [shape = 'u32[72,128]{1,0:T(1,128)}', space=vmem, size = 0x9000, scoped, tag = 'internal scratch']
  %s0 = inlined_call_operand.vmem [shape: bf16[16,4], index: 0, kind: input, shape index: {}]
  %s1 = inlined_call_operand.vmem [shape: bf16[16,16], index: 1, kind: input, shape index: {}]
  %s2 = inlined_call_operand.hbm [shape: bf16[112,128], index: 2, kind: input, shape index: {}]
  %s3 = inlined_call_operand.vmem [shape: f32[3,128], index: 3, kind: input, shape index: {}]
  %s4 = inlined_call_operand.vmem [shape: f32[16,128], index: 4, kind: output, shape index: {}]
  %s5 = sld [smem:[#allocation0]]
  $region30: #{_forward_impl.1} parent=0
    _
  %s7 = ssub.s32 1, %s5
  %s8 = scalar_select 0, %s7, %s5
  $region1: #{_forward_impl.1} parent=0
    #allocation2 [shape = 'u8[28672]{0}', space=vmem, size = 0x7000, scoped, tag = 'input window, operand 2, single buffered']
    #allocation3 [shape = 's32[1]{0}', space=sflag, size = 0x4, scoped, tag = 'scoped memory for _forward_impl.1']
    %9 = vsyncpa [#allocation3], 0
    // Predicated region
    $region2: #{_forward_impl.1} parent=1 // pred_check
      _
    $region3: #{_forward_impl.1} parent=1 // pred_check_branch
      %11 = sbr.rel (0) target = $region5
    $region4: #{_forward_impl.1} parent=1 // pred_region
      _
    $region5: #{_forward_impl.1} parent=1 // pred_fallthru
      _
    // Predicated region
    $region6: #{_forward_impl.1} parent=1 // pred_check
      _
    $region7: #{_forward_impl.1} parent=1 // pred_check_branch
      %13 = sbr.rel (0) target = $region9
    $region8: #{_forward_impl.1} parent=1 // pred_region
      _
    $region9: #{_forward_impl.1} parent=1 // pred_fallthru
      _
    // Predicated region
    $region10: #{_forward_impl.1} parent=1 // pred_check
      _
    $region11: #{_forward_impl.1} parent=1 // pred_check_branch
      %15 = sbr.rel (0) target = $region13
    $region12: #{_forward_impl.1} parent=1 // pred_region
      %17 = vsyncadd [#allocation3], 0
      %s18 = sshll.u32 %s2, 4
      %s19 = int_to_ptr.hbm [resolvable:$true] %s18
      %s20 = sshll.u32 [#allocation2], 4
      %s21 = int_to_ptr.vmem [resolvable:$true] %s20
      %26 = dma.hbm_to_vmem [thread:$0]  %s19, 896, %s21, [#allocation3], 64, 64, 4
    $region13: #{_forward_impl.1} parent=1 // pred_fallthru
      _
    // Predicated region
    $region14: #{_forward_impl.1} parent=1 // pred_check
      _
    $region15: #{_forward_impl.1} parent=1 // pred_check_branch
      %28 = sbr.rel (0) target = $region17
    $region16: #{_forward_impl.1} parent=1 // pred_region
      _
    $region17: #{_forward_impl.1} parent=1 // pred_fallthru
      _
    // Predicated region
    $region18: #{_forward_impl.1} parent=1 // pred_check
      _
    $region19: #{_forward_impl.1} parent=1 // pred_check_branch
      %30 = sbr.rel (0) target = $region21
    $region20: #{_forward_impl.1} parent=1 // pred_region
      %32 = dma.done [#allocation3], 896
    $region21: #{_forward_impl.1} parent=1 // pred_fallthru
      _
    %v34 = vld [vmem:[%s1] sm:$0xf]
    %v35 = vld [vmem:[%s1 + $0x4] sm:$0xf]
    %v36 = vld [vmem:[%s0] sm:$0xf]
    %v37 = vld [vmem:[%s0 + $0x4] sm:$0xf]
    %v40 = vunpack.c.l.b16 %v34
    %v41 = vunpack.c.l.b16 %v35
    %v42 = vpack.c.b16 %v41, %v40
    %v45 = vunpack.c.l.b16 %v36
    %v46 = vunpack.c.l.b16 %v37
    %v47 = vpack.c.b16 %v46, %v45
    %vm49 = vcmask 130048
    %v51 = vsel %vm49, %v42, 0
    %53 = vmatpush.bf16.msra.mxu0 0
    %54 = vmatpush.bf16.msra.mxu0 0
    %55 = vmatpush.bf16.msra.mxu0 0
    %56 = vmatpush.bf16.msra.mxu0 0
    %57 = vmatpush.bf16.msra.mxu0 0
    %58 = vmatpush.bf16.msra.mxu0 0
    %59 = vmatpush.bf16.msra.mxu0 0
    %60 = vmatpush.bf16.msra.mxu0 %v47
    %61 = vmatmul.bf16.gmra.mxu0 %v51
    %v62 = vpop.f32.mrf.mxu0
    %v63 = vadd.f32 0.0, %v62
    %v64 = vpop.f32.mrf.mxu0
    %v65 = vadd.f32 0.0, %v64
    %66 = vdwg.mxu0
    %v67 = vpack.c.bf16 %v63, %v63
    %v68 = vpack.c.bf16 %v65, %v65
    %v71 = vunpack.c.l.b16 %v67
    %v72 = vunpack.c.l.b16 %v68
    %v73 = vpack.c.b16 %v72, %v71
    %74 = vrot.lane.b32.xlu0 %v73, 4
    %v75 = vpop.permute.xlu0 %74
    %vm76 = vcmask 31744
    %v79 = vsel %vm76, %v47, %v75
    %v80 = vld [vmem:[#allocation2] sm:$0xf]
    %v81 = vld [vmem:[%s3] sm:$0x1]
    %v82 = vperm.slane %v81, 0
    %vm83 = vcmask 64512
    %v84 = vsel %vm83, %v79, 0
    %vm86 = vcmask 1043456
    %v88 = vsel %vm86, %v80, 0
    %90 = vmatpush.bf16.msra.mxu0 0
    %91 = vmatpush.bf16.msra.mxu0 0
    %92 = vmatpush.bf16.msra.mxu0 0
    %93 = vmatpush.bf16.msra.mxu0 0
    %94 = vmatpush.bf16.msra.mxu0 0
    %95 = vmatpush.bf16.msra.mxu0 0
    %96 = vmatpush.bf16.msra.mxu0 0
    %97 = vmatpush.bf16.msra.mxu0 %v88
    %98 = vmatmul.bf16.gmra.mxu0 %v84
    %v99 = vpop.f32.mrf.mxu0
    %v100 = vadd.f32 %v82, %v99
    %v101 = vpop.f32.mrf.mxu0
    %v102 = vadd.f32 %v82, %v101
    %103 = vdwg.mxu0
    %v104 = vtanh.pop %v100
    %v105 = vtanh.pop %v102
    %v106 = vpack.c.bf16 %v104, %v104
    %v107 = vpack.c.bf16 %v105, %v105
    %v110 = vunpack.c.l.b16 %v106
    %v111 = vunpack.c.l.b16 %v107
    %v112 = vpack.c.b16 %v111, %v110
    %114 = vmatpush.bf16.msra.mxu0 0
    %115 = vmatpush.bf16.msra.mxu0 0
    %116 = vmatpush.bf16.msra.mxu0 0
    %117 = vmatpush.bf16.msra.mxu0 0
    %118 = vmatpush.bf16.msra.mxu0 0
    %119 = vmatpush.bf16.msra.mxu0 0
    %120 = vmatpush.bf16.msra.mxu0 0
    %121 = vmatpush.bf16.msra.mxu0 %v112
    %122 = vmatmul.bf16.gmra.mxu0 %v51
    %v123 = vpop.f32.mrf.mxu0
    %v124 = vadd.f32 0.0, %v123
    %v125 = vpop.f32.mrf.mxu0
    %v126 = vadd.f32 0.0, %v125
    %127 = vdwg.mxu0
    %v128 = vpack.c.bf16 %v124, %v124
    %v129 = vpack.c.bf16 %v126, %v126
    %v132 = vunpack.c.l.b16 %v128
    %v133 = vunpack.c.l.b16 %v129
    %v134 = vpack.c.b16 %v133, %v132
    %135 = vrot.lane.b32.xlu0 %v134, 32
    %v136 = vpop.permute.xlu0 %135
    %vm137 = vcmask 261120
    %v140 = vsel %vm137, %v112, %v136
    %v141 = vld [vmem:[#allocation2 + $0x8] sm:$0xf]
    %v142 = vld [vmem:[#allocation2 + $0xc] sm:$0xf]
    %v143 = vld [vmem:[#allocation2 + $0x10] sm:$0xf]
    %v144 = vld [vmem:[#allocation2 + $0x14] sm:$0xf]
    %v145 = vld [vmem:[#allocation2 + $0x18] sm:$0xf]
    %v146 = vld [vmem:[#allocation2 + $0x1c] sm:$0xf]
    %v147 = vld [vmem:[#allocation2 + $0x20] sm:$0xf]
    %v148 = vld [vmem:[#allocation2 + $0x24] sm:$0xf]
    %v149 = vld [vmem:[%s3 + $0x1] sm:$0x1]
    %v150 = vperm.slane %v149, 0
    %v159 = vunpack.c.l.b16 %v141
    %v160 = vunpack.c.l.b16 %v142
    %v161 = vunpack.c.l.b16 %v143
    %v162 = vunpack.c.l.b16 %v144
    %v163 = vunpack.c.l.b16 %v145
    %v164 = vunpack.c.l.b16 %v146
    %v165 = vunpack.c.l.b16 %v147
    %v166 = vunpack.c.l.b16 %v148
    %v167 = vpack.c.b16 %v160, %v159
    %v168 = vpack.c.b16 %v162, %v161
    %v169 = vpack.c.b16 %v164, %v163
    %v170 = vpack.c.b16 %v166, %v165
    %vm175 = vcmask 523264
    %v176 = vsel %vm175, %v140, 0
    %178 = vmatpush.bf16.msra.mxu0 0
    %179 = vmatpush.bf16.msra.mxu0 0
    %180 = vmatpush.bf16.msra.mxu0 0
    %181 = vmatpush.bf16.msra.mxu0 0
    %182 = vmatpush.bf16.msra.mxu0 %v170
    %183 = vmatpush.bf16.msra.mxu0 %v169
    %184 = vmatpush.bf16.msra.mxu0 %v168
    %185 = vmatpush.bf16.msra.mxu0 %v167
    %186 = vmatmul.bf16.gmra.mxu0 %v176
    %v187 = vpop.f32.mrf.mxu0
    %v188 = vadd.f32 %v150, %v187
    %v189 = vpop.f32.mrf.mxu0
    %v190 = vadd.f32 %v150, %v189
    %191 = vdwg.mxu0
    %v192 = vtanh.pop %v188
    %v193 = vtanh.pop %v190
    %v194 = vpack.c.bf16 %v193, %v192
    %v195 = vld [vmem:[#allocation2 + $0x28] sm:$0xf]
    %v196 = vld [vmem:[#allocation2 + $0x2c] sm:$0xf]
    %v197 = vld [vmem:[#allocation2 + $0x30] sm:$0xf]
    %v198 = vld [vmem:[#allocation2 + $0x34] sm:$0xf]
    %v199 = vld [vmem:[%s3 + $0x2] sm:$0x1]
    %v200 = vperm.slane %v199, 0
    %v205 = vunpack.c.l.b16 %v195
    %v206 = vunpack.c.l.b16 %v196
    %v207 = vunpack.c.l.b16 %v197
    %v208 = vunpack.c.l.b16 %v198
    %v209 = vpack.c.b16 %v206, %v205
    %v210 = vpack.c.b16 %v208, %v207
    %v214 = vsel %vm137, %v194, 0
    %216 = vmatpush.bf16.msra.mxu0 0
    %217 = vmatpush.bf16.msra.mxu0 0
    %218 = vmatpush.bf16.msra.mxu0 0
    %219 = vmatpush.bf16.msra.mxu0 0
    %220 = vmatpush.bf16.msra.mxu0 0
    %221 = vmatpush.bf16.msra.mxu0 0
    %222 = vmatpush.bf16.msra.mxu0 %v210
    %223 = vmatpush.bf16.msra.mxu0 %v209
    %224 = vmatmul.bf16.gmra.mxu0 %v214
    %v225 = vpop.f32.mrf.mxu0
    %v226 = vadd.f32 %v200, %v225
    %v227 = vpop.f32.mrf.mxu0
    %v228 = vadd.f32 %v200, %v227
    %229 = vdwg.mxu0
    %230 = vst [vmem:[%s4] sm:$0xff] %v226
    %231 = vst [vmem:[%s4 + $0x8] sm:$0xff] %v228
    // Predicated region
    $region22: #{_forward_impl.1} parent=1 // pred_check
      _
    $region23: #{_forward_impl.1} parent=1 // pred_check_branch
      %233 = sbr.rel (0) target = $region25
    $region24: #{_forward_impl.1} parent=1 // pred_region
      _
    $region25: #{_forward_impl.1} parent=1 // pred_fallthru
      _
    // Predicated region
    $region26: #{_forward_impl.1} parent=1 // pred_check
      _
    $region27: #{_forward_impl.1} parent=1 // pred_check_branch
      %235 = sbr.rel (0) target = $region29
    $region28: #{_forward_impl.1} parent=1 // pred_region
      _
    $region29: #{_forward_impl.1} parent=1 // pred_fallthru
      _
    %236 = vsyncpa [#allocation3], 1

</llo_original>
